<compile_context>
chip_gen: v7x
topology: tpu7x:2x2x1
jax: 0.10.0
libtpu: 0.0.40
codegen_flags: <defaults>
</compile_context>

<pallas_src>
import functools

import jax
import jax.numpy as jnp
from jax.experimental import pallas as pl
from jax.experimental.pallas import tpu as pltpu


def _round_up(x, m):
    return ((x + m - 1) // m) * m


def tmcnn_kernel(x_ref, wc_ref, bc_ref, out_ref):
    # x_ref  : (TB, K_pad)     bf16 batch tile of flattened input
    # wc_ref : (K_pad, M_pad)  bf16 fused conv1∘conv2 weight (VMEM-resident)
    # bc_ref : (1, M_pad)      f32 fused bias
    # out_ref: (TB, M_pad)     f32 lane-dense output tile
    acc = jnp.dot(x_ref[...], wc_ref[...], preferred_element_type=jnp.float32)
    out_ref[...] = (acc + bc_ref[...]).astype(out_ref.dtype)


def prepare_tmcnn_params(w1, b1, w2, b2, *, num_node, output_size, seq_length,
                         compute_dtype=jnp.bfloat16):
    """One-time (model-load) weight fusion + padding.

    w1: (O, S, 1, N, 1), b1: (O,), w2: (O*N, O, 1, 1, 1), b2: (O*N,)
    Returns (wc_padded, bc_padded) with shapes (K_pad, M_pad) / (1, M_pad).
    """
    S, N, O = seq_length, num_node, output_size
    K, M = S * N, O * N
    K_pad = _round_up(K, 64)      # MXU-friendly contraction width (48 -> 64)
    M_pad = _round_up(M, 128)     # lane-dense output (avoids masked stores)

    # Row-major flatten of conv1's contraction dims (C_in=S, kH=N) matches
    # Conv3d's (O, S, 1, N, 1) weight layout exactly.
    w1_flat = w1.reshape(O, K).T.astype(jnp.float32)          # (K, O)
    w2_flat = w2.reshape(M, O).T.astype(jnp.float32)          # (O, M)
    wc = w1_flat @ w2_flat                                     # (K, M), f32
    bc = (b1.reshape(1, O).astype(jnp.float32) @ w2_flat
          + b2.reshape(1, M).astype(jnp.float32))              # (1, M), f32

    wc_padded = jnp.zeros((K_pad, M_pad), jnp.float32).at[:K, :M].set(wc)
    bc_padded = jnp.zeros((1, M_pad), jnp.float32).at[:, :M].set(bc)
    return wc_padded.astype(compute_dtype), bc_padded


@functools.partial(jax.jit, static_argnames=(
    "num_node", "output_size", "seq_length", "block_batch", "compute_dtype"))
def tmcnn_forward(x, wc_padded, bc_padded, *, num_node, output_size,
                  seq_length, block_batch=256, compute_dtype=jnp.bfloat16):
    """x: (B, seq_length, 1, num_node, 1)  ->  (B, num_node, output_size)."""
    B, S, D, N, W = x.shape
    assert (S, D, N, W) == (seq_length, 1, num_node, 1)
    O = output_size
    K, M = S * N, O * N
    K_pad, M_pad = wc_padded.shape

    x_flat = x.reshape(B, K).astype(compute_dtype)

    # Batch tiling: TB multiple of 8 (sublanes); single full-array block if
    # the whole batch fits one tile (then B need not be a multiple of 8).
    tb = min(block_batch, B)
    if tb < B:
        tb = max(8, (tb // 8) * 8)
        B_pad = _round_up(B, tb)
    else:
        B_pad = B
    if (B_pad, K_pad) != (B, K):
        x_flat = jnp.pad(x_flat, ((0, B_pad - B), (0, K_pad - K)))

    grid = (B_pad // tb,)

    # VMEM budget: double-buffered x/out tiles + resident fused weight/bias.
    vmem_bytes = (2 * (tb * K_pad * x_flat.dtype.itemsize + tb * M_pad * 4)
                  + K_pad * M_pad * wc_padded.dtype.itemsize + M_pad * 4)
    vmem_limit = min(max(2 * vmem_bytes, 4 * 1024 * 1024), 32 * 1024 * 1024)

    out_padded = pl.pallas_call(
        tmcnn_kernel,
        out_shape=jax.ShapeDtypeStruct((B_pad, M_pad), jnp.float32),
        grid_spec=pltpu.PrefetchScalarGridSpec(
            num_scalar_prefetch=0,
            grid=grid,
            in_specs=[
                pl.BlockSpec((tb, K_pad), lambda i: (i, 0)),
                pl.BlockSpec((K_pad, M_pad), lambda i: (0, 0)),
                pl.BlockSpec((1, M_pad), lambda i: (0, 0)),
            ],
            out_specs=pl.BlockSpec((tb, M_pad), lambda i: (i, 0)),
        ),
        compiler_params=pltpu.CompilerParams(
            dimension_semantics=("parallel",),   # v7x: shard tiles over 2 TCs
            vmem_limit_bytes=vmem_limit,
        ),
    )(x_flat, wc_padded, bc_padded)

    # squeeze(2).reshape(B, num_node, output_size): channel k = n*O + o.
    return out_padded[:B, :M].reshape(B, N, O)


def reference_forward(x, w1, b1, w2, b2, *, num_node, output_size):
    B, S, _, N, _ = x.shape
    O = output_size
    x_flat = x.reshape(B, S * N).astype(jnp.float32)
    y1 = x_flat @ w1.reshape(O, S * N).T + b1            # conv1 -> (B, O)
    y2 = y1 @ w2.reshape(O * N, O).T + b2                # conv2 -> (B, O*N)
    return y2.reshape(B, N, O)


if __name__ == "__main__":
    # Shapes consistent with the module; batch large enough that the batch
    # grid / pipelining actually engages (grid of 2 tiles).
    in_channels = 1
    num_node = 8
    output_size = 4
    batch_size = 256
    seq_length = 6
    block_batch = 128

    key = jax.random.PRNGKey(0)
    kx, kw1, kb1, kw2, kb2 = jax.random.split(key, 5)

    # Input: (B, seq_length, 1, num_node, 1)  (NCDHW for Conv3d)
    x = jax.random.normal(kx, (batch_size, seq_length, 1, num_node, 1),
                          dtype=jnp.float32)

    # Deterministic synthetic parameters (module __init__ shapes):
    # end_conv_1: Conv3d(seq_length, output_size, (1, num_node, 1), bias=True)
    w1 = 0.1 * jax.random.normal(
        kw1, (output_size, seq_length, 1, num_node, 1), dtype=jnp.float32)
    b1 = 0.1 * jax.random.normal(kb1, (output_size,), dtype=jnp.float32)
    # end_conv_2: Conv3d(output_size, output_size*num_node, 1, bias=True)
    w2 = 0.1 * jax.random.normal(
        kw2, (output_size * num_node, output_size, 1, 1, 1), dtype=jnp.float32)
    b2 = 0.1 * jax.random.normal(kb2, (output_size * num_node,),
                                 dtype=jnp.float32)
    # TODO(synk): self.relu and self.fc exist in __init__ but are unused in
    # forward, so they are intentionally not implemented.

    # One-time weight fusion/padding (model-load time, not per forward call).
    wc, bc = prepare_tmcnn_params(
        w1, b1, w2, b2, num_node=num_node, output_size=output_size,
        seq_length=seq_length, compute_dtype=jnp.bfloat16)

    out = tmcnn_forward(x, wc, bc, num_node=num_node, output_size=output_size,
                        seq_length=seq_length, block_batch=block_batch,
                        compute_dtype=jnp.bfloat16)
    out = jax.block_until_ready(out)

    ref = reference_forward(x, w1, b1, w2, b2,
                            num_node=num_node, output_size=output_size)
    assert out.shape == (batch_size, num_node, output_size)
    # bf16 MXU inputs with f32 accumulation: compare to the f32 two-matmul
    # reference with a correspondingly loose tolerance.
    err = float(jnp.max(jnp.abs(out - ref)))
    assert jnp.allclose(out, ref, atol=2e-2, rtol=2e-2), err

    print("KERNEL_OK")
</pallas_src>

<mosaic_0001>
module attributes {stable_mosaic.version = 11 : i64} {
  func.func @tmcnn_kernel(%arg0: i32, %arg1: memref<128x64xbf16, #tpu.memory_space<vmem>>, %arg2: memref<64x128xbf16, #tpu.memory_space<vmem>>, %arg3: memref<1x128xf32, #tpu.memory_space<vmem>>, %arg4: memref<128x128xf32, #tpu.memory_space<vmem>>) attributes {dimension_semantics = [#tpu.dimension_semantics<parallel>], iteration_bounds = array<i64: 2>, scalar_prefetch = 0 : i64, scratch_operands = 0 : i64, tpu.core_type = #tpu.core_type<tc>, window_params = [{transform_indices = @transform_0, window_bounds = array<i64: 128, 64>}, {pipeline_mode = #tpu.pipeline_mode<synchronous>, transform_indices = @transform_1, window_bounds = array<i64: 64, 128>}, {pipeline_mode = #tpu.pipeline_mode<synchronous>, transform_indices = @transform_2, window_bounds = array<i64: 1, 128>}, {transform_indices = @transform_3, window_bounds = array<i64: 128, 128>}]} {
    %c0 = arith.constant 0 : index
    %c0_0 = arith.constant 0 : index
    %0 = vector.load %arg1[%c0, %c0_0] : memref<128x64xbf16, #tpu.memory_space<vmem>>, vector<128x64xbf16>
    %c0_1 = arith.constant 0 : index
    %c0_2 = arith.constant 0 : index
    %1 = vector.load %arg2[%c0_1, %c0_2] : memref<64x128xbf16, #tpu.memory_space<vmem>>, vector<64x128xbf16>
    %cst = arith.constant dense<0.000000e+00> : vector<128x128xf32>
    %2 = tpu.matmul %0, %1, %cst {dimension_numbers = #tpu.dot_dimension_numbers<[1], [0], [0], [1], [0, 0, 1, 1], [], []>} : vector<128x64xbf16>, vector<64x128xbf16>, vector<128x128xf32> -> vector<128x128xf32>
    %c0_3 = arith.constant 0 : index
    %c0_4 = arith.constant 0 : index
    %3 = vector.load %arg3[%c0_3, %c0_4] : memref<1x128xf32, #tpu.memory_space<vmem>>, vector<1x128xf32>
    %4 = vector.broadcast %3 : vector<1x128xf32> to vector<128x128xf32>
    %5 = arith.addf %2, %4 : vector<128x128xf32>
    %c0_5 = arith.constant 0 : index
    %c0_6 = arith.constant 0 : index
    %6 = vector.load %arg4[%c0_5, %c0_6] : memref<128x128xf32, #tpu.memory_space<vmem>>, vector<128x128xf32>
    tpu.vector_store %arg4[%c0_5, %c0_6], %5 {strides = array<i32>} : memref<128x128xf32, #tpu.memory_space<vmem>>, vector<128x128xf32>,
    return
  }
  func.func @transform_0(%arg0: i32) -> (i32, i32) {
    %c0_i32 = arith.constant 0 : i32
    %c0_i32_0 = arith.constant 0 : i32
    return %arg0, %c0_i32 : i32, i32
  }
  func.func @transform_1(%arg0: i32) -> (i32, i32) {
    %c0_i32 = arith.constant 0 : i32
    %c0_i32_0 = arith.constant 0 : i32
    %c0_i32_1 = arith.constant 0 : i32
    return %c0_i32, %c0_i32_0 : i32, i32
  }
  func.func @transform_2(%arg0: i32) -> (i32, i32) {
    %c0_i32 = arith.constant 0 : i32
    %c0_i32_0 = arith.constant 0 : i32
    %c0_i32_1 = arith.constant 0 : i32
    return %c0_i32, %c0_i32_0 : i32, i32
  }
  func.func @transform_3(%arg0: i32) -> (i32, i32) {
    %c0_i32 = arith.constant 0 : i32
    %c0_i32_0 = arith.constant 0 : i32
    return %arg0, %c0_i32 : i32, i32
  }
}

</mosaic_0001>

<llo_original>
// kernel: tmcnn_forward.1
$region0: #{tmcnn_forward.1}
  #allocation0 [shape = 'u32[]', space=smem, size = 0x4, offset = 0x4, fixed_abs, tag = 'smem constant byte address 0x4 - core index']
  #allocation1 [shape = 'u32[144,128]{1,0:T(1,128)}', space=vmem, size = 0x12000, scoped, tag = 'internal scratch']
  %s0 = inlined_call_operand.vmem [shape: bf16[256,64], index: 0, kind: input, shape index: {}]
  %s1 = inlined_call_operand.vmem [shape: bf16[64,128], index: 1, kind: input, shape index: {}]
  %s2 = inlined_call_operand.vmem [shape: f32[1,128], index: 2, kind: input, shape index: {}]
  %s3 = inlined_call_operand.vmem [shape: f32[256,128], index: 3, kind: output, shape index: {}]
  %s4 = sld [smem:[#allocation0]]
  $region45: #{tmcnn_forward.1} parent=0
    _
  %s6 = ssub.s32 1, %s4
  %s7 = scalar_select 0, %s6, %s4
  loop: start=0, step=1, limit=4
  $region2: #{tmcnn_forward.1} parent=0 // loop_pre_header
    _
  $region3: #{tmcnn_forward.1} parent=0 // loop_header
    %s9 = sphi 0, %s13
    %p10 = scmp.ge.s32.totalorder %s9, 4
    %s19 = sphi 0, %s21
    %s22 = sphi 0, %s19
    %s23 = sphi 0, %s22
    %s39 = sphi 0, %s23
    %s43 = sphi 0, %s43
    %s45 = sphi 0, %s43
    %s46 = sphi 0, %s45
    %s60 = sphi 0, %s46
    %s64 = sphi 0, %s64
    %s66 = sphi 0, %s64
    %s67 = sphi 0, %s66
    %s81 = sphi 0, %s67
    %s87 = sphi 0, %s89
    %s90 = sphi 0, %s87
    %s91 = sphi 0, %s90
    %s107 = sphi 0, %s91
  $region4: #{tmcnn_forward.1} parent=0 // loop_header_branch
    %12 = sbr.rel (%p10) target = $region8
  $region5: #{tmcnn_forward.1} parent=0 // loop_body
    %s14 = ssub.s32 %s9, 1
    %s15 = ssub.s32 %s9, 2
    %s16 = sadd.s32 %s9, 1
    %s17 = ssub.s32 %s9, %s16
    %p18 = scmp.eq.s32.totalorder %s17, 0
    %s20 = sadd.s32 %s19, 1
    %s21 = scalar_select %p18, %s19, %s20
    %p24 = pneg %p18
    %p25 = scmp.eq.s32.totalorder %s9, 1
    %p26 = por %p24, %p25
    %p27 = scmp.ne.s32.totalorder %s19, %s22
    %p28 = scmp.eq.s32.totalorder %s9, 0
    %p29 = por %p27, %p28
    %p30 = scmp.ne.s32.totalorder %s19, %s22
    %p31 = scmp.eq.s32.totalorder %s14, 1
    %p32 = por %p30, %p31
    %p33 = scmp.ne.s32.totalorder %s22, %s23
    %p34 = scmp.eq.s32.totalorder %s14, 0
    %p35 = por %p33, %p34
    %p36 = scmp.ne.s32.totalorder %s22, %s23
    %p37 = scmp.eq.s32.totalorder %s15, 1
    %p38 = por %p36, %p37
    %p40 = scmp.ne.s32.totalorder %s23, %s39
    %p41 = scmp.eq.s32.totalorder %s15, 0
    %p42 = por %p40, %p41
    %s44 = sadd.s32 %s43, 1
    %p47 = scmp.eq.s32.totalorder %s9, 1
    %p48 = scmp.ne.s32.totalorder %s43, %s45
    %p49 = scmp.eq.s32.totalorder %s9, 0
    %p50 = por %p48, %p49
    %p51 = scmp.ne.s32.totalorder %s43, %s45
    %p52 = scmp.eq.s32.totalorder %s14, 1
    %p53 = por %p51, %p52
    %p54 = scmp.ne.s32.totalorder %s45, %s46
    %p55 = scmp.eq.s32.totalorder %s14, 0
    %p56 = por %p54, %p55
    %p57 = scmp.ne.s32.totalorder %s45, %s46
    %p58 = scmp.eq.s32.totalorder %s15, 1
    %p59 = por %p57, %p58
    %p61 = scmp.ne.s32.totalorder %s46, %s60
    %p62 = scmp.eq.s32.totalorder %s15, 0
    %p63 = por %p61, %p62
    %s65 = sadd.s32 %s64, 1
    %p68 = scmp.eq.s32.totalorder %s9, 1
    %p69 = scmp.ne.s32.totalorder %s64, %s66
    %p70 = scmp.eq.s32.totalorder %s9, 0
    %p71 = por %p69, %p70
    %p72 = scmp.ne.s32.totalorder %s64, %s66
    %p73 = scmp.eq.s32.totalorder %s14, 1
    %p74 = por %p72, %p73
    %p75 = scmp.ne.s32.totalorder %s66, %s67
    %p76 = scmp.eq.s32.totalorder %s14, 0
    %p77 = por %p75, %p76
    %p78 = scmp.ne.s32.totalorder %s66, %s67
    %p79 = scmp.eq.s32.totalorder %s15, 1
    %p80 = por %p78, %p79
    %p82 = scmp.ne.s32.totalorder %s67, %s81
    %p83 = scmp.eq.s32.totalorder %s15, 0
    %p84 = por %p82, %p83
    %s85 = ssub.s32 %s9, %s16
    %p86 = scmp.eq.s32.totalorder %s85, 0
    %s88 = sadd.s32 %s87, 1
    %s89 = scalar_select %p86, %s87, %s88
    %p92 = pneg %p86
    %p93 = scmp.eq.s32.totalorder %s9, 1
    %p94 = por %p92, %p93
    %p95 = scmp.ne.s32.totalorder %s87, %s90
    %p96 = scmp.eq.s32.totalorder %s9, 0
    %p97 = por %p95, %p96
    %p98 = scmp.ne.s32.totalorder %s87, %s90
    %p99 = scmp.eq.s32.totalorder %s14, 1
    %p100 = por %p98, %p99
    %p101 = scmp.ne.s32.totalorder %s90, %s91
    %p102 = scmp.eq.s32.totalorder %s14, 0
    %p103 = por %p101, %p102
    %p104 = scmp.ne.s32.totalorder %s90, %s91
    %p105 = scmp.eq.s32.totalorder %s15, 1
    %p106 = por %p104, %p105
    %p108 = scmp.ne.s32.totalorder %s91, %s107
    %p109 = scmp.eq.s32.totalorder %s15, 0
    %p110 = por %p108, %p109
    %p111 = scmp.le.s32.totalorder 1, %s9
    %p112 = scmp.lt.s32.totalorder %s9, 3
    %p113 = pnand %p111, %p112
    %p114 = pneg %p113
    // Predicated region
    $region9: #{tmcnn_forward.1} parent=5 // pred_check
      _
    $region10: #{tmcnn_forward.1} parent=5 // pred_check_branch
      %116 = sbr.rel (%p113) target = $region12
    $region11: #{tmcnn_forward.1} parent=5 // pred_region
      %s117 = ssub.s32 %s9, 1
      // Predicated region
      $region13: #{tmcnn_forward.1} parent=11 // pred_check
        %p118 = pneg %p56
      $region14: #{tmcnn_forward.1} parent=11 // pred_check_branch
        %120 = sbr.rel (%p118) target = $region16
      $region15: #{tmcnn_forward.1} parent=11 // pred_region
        _
      $region16: #{tmcnn_forward.1} parent=11 // pred_fallthru
        _
      // Predicated region
      $region17: #{tmcnn_forward.1} parent=11 // pred_check
        %p121 = pneg %p77
      $region18: #{tmcnn_forward.1} parent=11 // pred_check_branch
        %123 = sbr.rel (%p121) target = $region20
      $region19: #{tmcnn_forward.1} parent=11 // pred_region
        _
      $region20: #{tmcnn_forward.1} parent=11 // pred_fallthru
        _
    $region12: #{tmcnn_forward.1} parent=5 // pred_fallthru
      _
    %p124 = scmp.lt.s32.totalorder %s9, 2
    // Predicated region
    $region21: #{tmcnn_forward.1} parent=5 // pred_check
      %p125 = pneg %p124
    $region22: #{tmcnn_forward.1} parent=5 // pred_check_branch
      %127 = sbr.rel (%p125) target = $region24
    $region23: #{tmcnn_forward.1} parent=5 // pred_region
      // Predicated region
      $region25: #{tmcnn_forward.1} parent=23 // pred_check
        %p128 = pneg %p29
      $region26: #{tmcnn_forward.1} parent=23 // pred_check_branch
        %130 = sbr.rel (%p128) target = $region28
      $region27: #{tmcnn_forward.1} parent=23 // pred_region
        %s131 = smul.u32 16, %s9
        %p132 = scmp.lt.s32.totalorder %s131, 31
        %s133 = scalar_select %p132, %s131, 31
        %s134 = smul.addr %s133, 4
        %s135 = scalar_lea.vmem %s0, %s134
        %s136 = smul.u32 16, %s9
      $region28: #{tmcnn_forward.1} parent=23 // pred_fallthru
        _
    $region24: #{tmcnn_forward.1} parent=5 // pred_fallthru
      _
    %p137 = scmp.le.s32.totalorder 1, %s9
    %p138 = scmp.lt.s32.totalorder %s9, 3
    %p139 = pnand %p137, %p138
    %p140 = pneg %p139
    // Predicated region
    $region29: #{tmcnn_forward.1} parent=5 // pred_check
      _
    $region30: #{tmcnn_forward.1} parent=5 // pred_check_branch
      %142 = sbr.rel (%p139) target = $region32
    $region31: #{tmcnn_forward.1} parent=5 // pred_region
      %s143 = ssub.s32 %s9, 1
      %s144 = smul.u32 16, %s14
      %p145 = scmp.lt.s32.totalorder %s144, 31
      %s146 = scalar_select %p145, %s144, 31
      %s147 = smul.addr %s146, 4
      %s148 = scalar_lea.vmem %s0, %s147
      %p149 = pneg %p35
      %p150 = pneg %p32
      %p151 = pneg %p56
      %p152 = pneg %p53
      %p153 = pneg %p77
      %p154 = pneg %p74
      %p155 = pneg %p103
      %p156 = pneg %p100
      %s157 = smul.u32 16, %s14
      %p158 = scmp.lt.s32.totalorder %s157, 31
      %s159 = scalar_select %p158, %s157, 31
      %s160 = smul.addr %s159, 8
      %s161 = scalar_lea.vmem %s3, %s160
      %s162 = smul.u32 16, %s14
      %p163 = scmp.lt.s32.totalorder %s162, 31
      %s164 = scalar_select %p163, %s162, 31
      %s165 = smul.addr %s164, 4
      %s166 = scalar_lea.vmem %s0, %s165
      %s167 = smul.u32 16, %s14
      %s168 = smul.u32 16, %s14
      %p169 = scmp.lt.s32.totalorder %s168, 31
      %s170 = scalar_select %p169, %s168, 31
      %s171 = smul.addr %s170, 8
      %s172 = scalar_lea.vmem %s3, %s171
      %s173 = smul.u32 16, %s14
      %v175 = vld [vmem:[%s166] sm:$0xf]
      %v176 = vld [vmem:[%s166 + $0x4] sm:$0xf]
      %v177 = vld [vmem:[%s166 + $0x8] sm:$0xf]
      %v178 = vld [vmem:[%s166 + $0xc] sm:$0xf]
      %v179 = vld [vmem:[%s166 + $0x10] sm:$0xf]
      %v180 = vld [vmem:[%s166 + $0x14] sm:$0xf]
      %v181 = vld [vmem:[%s166 + $0x18] sm:$0xf]
      %v182 = vld [vmem:[%s166 + $0x1c] sm:$0xf]
      %v183 = vld [vmem:[%s166 + $0x20] sm:$0xf]
      %v184 = vld [vmem:[%s166 + $0x24] sm:$0xf]
      %v185 = vld [vmem:[%s166 + $0x28] sm:$0xf]
      %v186 = vld [vmem:[%s166 + $0x2c] sm:$0xf]
      %v187 = vld [vmem:[%s166 + $0x30] sm:$0xf]
      %v188 = vld [vmem:[%s166 + $0x34] sm:$0xf]
      %v189 = vld [vmem:[%s166 + $0x38] sm:$0xf]
      %v190 = vld [vmem:[%s166 + $0x3c] sm:$0xf]
      %v191 = vld [vmem:[%s1] sm:$0xf]
      %v192 = vld [vmem:[%s1 + $0x4] sm:$0xf]
      %v193 = vld [vmem:[%s1 + $0x8] sm:$0xf]
      %v194 = vld [vmem:[%s1 + $0xc] sm:$0xf]
      %v195 = vld [vmem:[%s1 + $0x10] sm:$0xf]
      %v196 = vld [vmem:[%s1 + $0x14] sm:$0xf]
      %v197 = vld [vmem:[%s1 + $0x18] sm:$0xf]
      %v198 = vld [vmem:[%s1 + $0x1c] sm:$0xf]
      %v199 = vld [vmem:[%s2] sm:$0x1]
      %v201 = vlaneseq
      %v202 = vshrl.u32 %v201, 7
      %v203 = vsub.s32 0, %v202
      %v204 = vrot.slane %v199, %v203
      %v222 = vunpack.c.l.b16 %v175
      %v223 = vunpack.c.l.b16 %v176
      %v224 = vunpack.c.l.b16 %v177
      %v225 = vunpack.c.l.b16 %v178
      %v226 = vunpack.c.l.b16 %v179
      %v227 = vunpack.c.l.b16 %v180
      %v228 = vunpack.c.l.b16 %v181
      %v229 = vunpack.c.l.b16 %v182
      %v230 = vunpack.c.l.b16 %v183
      %v231 = vunpack.c.l.b16 %v184
      %v232 = vunpack.c.l.b16 %v185
      %v233 = vunpack.c.l.b16 %v186
      %v234 = vunpack.c.l.b16 %v187
      %v235 = vunpack.c.l.b16 %v188
      %v236 = vunpack.c.l.b16 %v189
      %v237 = vunpack.c.l.b16 %v190
      %v238 = vpack.c.b16 %v223, %v222
      %v239 = vpack.c.b16 %v225, %v224
      %v240 = vpack.c.b16 %v227, %v226
      %v241 = vpack.c.b16 %v229, %v228
      %v242 = vpack.c.b16 %v231, %v230
      %v243 = vpack.c.b16 %v233, %v232
      %v244 = vpack.c.b16 %v235, %v234
      %v245 = vpack.c.b16 %v237, %v236
      %v254 = vunpack.c.l.b16 %v191
      %v255 = vunpack.c.l.b16 %v192
      %v256 = vunpack.c.l.b16 %v193
      %v257 = vunpack.c.l.b16 %v194
      %v258 = vunpack.c.l.b16 %v195
      %v259 = vunpack.c.l.b16 %v196
      %v260 = vunpack.c.l.b16 %v197
      %v261 = vunpack.c.l.b16 %v198
      %v262 = vpack.c.b16 %v255, %v254
      %v263 = vpack.c.b16 %v257, %v256
      %v264 = vpack.c.b16 %v259, %v258
      %v265 = vpack.c.b16 %v261, %v260
      %vm270 = vcmask 523264
      %v272 = vsel %vm270, %v238, 0
      %v275 = vsel %vm270, %v239, 0
      %v278 = vsel %vm270, %v240, 0
      %v281 = vsel %vm270, %v241, 0
      %v284 = vsel %vm270, %v242, 0
      %v287 = vsel %vm270, %v243, 0
      %v290 = vsel %vm270, %v244, 0
      %v293 = vsel %vm270, %v245, 0
      %295 = vmatprep.subr.bf16.mxu0 0
      %296 = vmatpush1.bf16.msra.mxu0 %v262
      %297 = vmatprep.subr.bf16.mxu0 0
      %298 = vmatpush1.bf16.msra.mxu0 %v263
      %299 = vmatprep.subr.bf16.mxu0 0
      %300 = vmatpush1.bf16.msra.mxu0 %v264
      %301 = vmatprep.subr.bf16.mxu0 0
      %302 = vmatpush1.bf16.msra.mxu0 %v265
      %303 = vmatprep.subr.bf16.mxu0 0
      %304 = vmatpush1.bf16.msra.mxu0 0
      %305 = vmatprep.subr.bf16.mxu0 0
      %306 = vmatpush1.bf16.msra.mxu0 0
      %307 = vmatprep.subr.bf16.mxu0 0
      %308 = vmatpush1.bf16.msra.mxu0 0
      %309 = vmatprep.subr.bf16.mxu0 0
      %310 = vmatpush1.bf16.msra.mxu0 0
      %311 = vmatprep.subr.bf16.mxu0 0
      %312 = vmatpush1.bf16.msra.mxu0 0
      %313 = vmatprep.subr.bf16.mxu0 0
      %314 = vmatpush1.bf16.msra.mxu0 0
      %315 = vmatprep.subr.bf16.mxu0 0
      %316 = vmatpush1.bf16.msra.mxu0 0
      %317 = vmatprep.subr.bf16.mxu0 0
      %318 = vmatpush1.bf16.msra.mxu0 0
      %319 = vmatprep.subr.bf16.mxu0 0
      %320 = vmatpush1.bf16.msra.mxu0 0
      %321 = vmatprep.subr.bf16.mxu0 0
      %322 = vmatpush1.bf16.msra.mxu0 0
      %323 = vmatprep.subr.bf16.mxu0 0
      %324 = vmatpush1.bf16.msra.mxu0 0
      %325 = vmatprep.subr.bf16.mxu0 0
      %326 = vmatpush1.bf16.msra.mxu0 0
      %327 = vmatprep.mubr.bf16.mxu0 0
      %328 = vmatmul.mubr.bf16.gmra.mrb[0].mxu0 %v272
      %v329 = vpop.f32.mrb[0].mxu0
      %v330 = vadd.f32 %v204, %v329
      %v331 = vpop.f32.mrb[0].mxu0
      %v332 = vpop.f32.mrb[0].mxu0
      %v333 = vadd.f32 %v204, %v332
      %v334 = vpop.f32.mrb[0].mxu0
      %335 = vmatprep.mubr.bf16.mxu0 0
      %336 = vmatmul.mubr.bf16.gmra.mrb[0].mxu0 %v275
      %v337 = vpop.f32.mrb[0].mxu0
      %v338 = vadd.f32 %v204, %v337
      %v339 = vpop.f32.mrb[0].mxu0
      %v340 = vpop.f32.mrb[0].mxu0
      %v341 = vadd.f32 %v204, %v340
      %v342 = vpop.f32.mrb[0].mxu0
      %343 = vmatprep.mubr.bf16.mxu0 0
      %344 = vmatmul.mubr.bf16.gmra.mrb[0].mxu0 %v278
      %v345 = vpop.f32.mrb[0].mxu0
      %v346 = vadd.f32 %v204, %v345
      %v347 = vpop.f32.mrb[0].mxu0
      %v348 = vpop.f32.mrb[0].mxu0
      %v349 = vadd.f32 %v204, %v348
      %v350 = vpop.f32.mrb[0].mxu0
      %351 = vmatprep.mubr.bf16.mxu0 0
      %352 = vmatmul.mubr.bf16.gmra.mrb[0].mxu0 %v281
      %v353 = vpop.f32.mrb[0].mxu0
      %v354 = vadd.f32 %v204, %v353
      %v355 = vpop.f32.mrb[0].mxu0
      %v356 = vpop.f32.mrb[0].mxu0
      %v357 = vadd.f32 %v204, %v356
      %v358 = vpop.f32.mrb[0].mxu0
      %359 = vmatprep.mubr.bf16.mxu0 0
      %360 = vmatmul.mubr.bf16.gmra.mrb[0].mxu0 %v284
      %v361 = vpop.f32.mrb[0].mxu0
      %v362 = vadd.f32 %v204, %v361
      %v363 = vpop.f32.mrb[0].mxu0
      %v364 = vpop.f32.mrb[0].mxu0
      %v365 = vadd.f32 %v204, %v364
      %v366 = vpop.f32.mrb[0].mxu0
      %367 = vmatprep.mubr.bf16.mxu0 0
      %368 = vmatmul.mubr.bf16.gmra.mrb[0].mxu0 %v287
      %v369 = vpop.f32.mrb[0].mxu0
      %v370 = vadd.f32 %v204, %v369
      %v371 = vpop.f32.mrb[0].mxu0
      %v372 = vpop.f32.mrb[0].mxu0
      %v373 = vadd.f32 %v204, %v372
      %v374 = vpop.f32.mrb[0].mxu0
      %375 = vmatprep.mubr.bf16.mxu0 0
      %376 = vmatmul.mubr.bf16.gmra.mrb[0].mxu0 %v290
      %v377 = vpop.f32.mrb[0].mxu0
      %v378 = vadd.f32 %v204, %v377
      %v379 = vpop.f32.mrb[0].mxu0
      %v380 = vpop.f32.mrb[0].mxu0
      %v381 = vadd.f32 %v204, %v380
      %v382 = vpop.f32.mrb[0].mxu0
      %383 = vmatprep.mubr.bf16.mxu0 0
      %384 = vmatmul.mubr.bf16.gmra.mrb[0].mxu0 %v293
      %v385 = vpop.f32.mrb[0].mxu0
      %v386 = vadd.f32 %v204, %v385
      %v387 = vpop.f32.mrb[0].mxu0
      %v388 = vpop.f32.mrb[0].mxu0
      %v389 = vadd.f32 %v204, %v388
      %v390 = vpop.f32.mrb[0].mxu0
      %391 = vdwg.mxu0
      %392 = vst [vmem:[%s172] sm:$0xff] %v330
      %393 = vst [vmem:[%s172 + $0x8] sm:$0xff] %v333
      %394 = vst [vmem:[%s172 + $0x10] sm:$0xff] %v338
      %395 = vst [vmem:[%s172 + $0x18] sm:$0xff] %v341
      %396 = vst [vmem:[%s172 + $0x20] sm:$0xff] %v346
      %397 = vst [vmem:[%s172 + $0x28] sm:$0xff] %v349
      %398 = vst [vmem:[%s172 + $0x30] sm:$0xff] %v354
      %399 = vst [vmem:[%s172 + $0x38] sm:$0xff] %v357
      %400 = vst [vmem:[%s172 + $0x40] sm:$0xff] %v362
      %401 = vst [vmem:[%s172 + $0x48] sm:$0xff] %v365
      %402 = vst [vmem:[%s172 + $0x50] sm:$0xff] %v370
      %403 = vst [vmem:[%s172 + $0x58] sm:$0xff] %v373
      %404 = vst [vmem:[%s172 + $0x60] sm:$0xff] %v378
      %405 = vst [vmem:[%s172 + $0x68] sm:$0xff] %v381
      %406 = vst [vmem:[%s172 + $0x70] sm:$0xff] %v386
      %407 = vst [vmem:[%s172 + $0x78] sm:$0xff] %v389
      %s408 = smul.u32 16, %s14
      %p409 = scmp.lt.s32.totalorder %s408, 31
      %s410 = scalar_select %p409, %s408, 31
      %s411 = smul.addr %s410, 8
      %s412 = scalar_lea.vmem %s3, %s411
      // Predicated region
      $region33: #{tmcnn_forward.1} parent=31 // pred_check
        %p413 = pneg %p100
      $region34: #{tmcnn_forward.1} parent=31 // pred_check_branch
        %415 = sbr.rel (%p413) target = $region36
      $region35: #{tmcnn_forward.1} parent=31 // pred_region
        %s416 = smul.u32 16, %s14
      $region36: #{tmcnn_forward.1} parent=31 // pred_fallthru
        _
    $region32: #{tmcnn_forward.1} parent=5 // pred_fallthru
      _
    %p417 = scmp.le.s32.totalorder 2, %s9
    // Predicated region
    $region37: #{tmcnn_forward.1} parent=5 // pred_check
      %p418 = pneg %p417
    $region38: #{tmcnn_forward.1} parent=5 // pred_check_branch
      %420 = sbr.rel (%p418) target = $region40
    $region39: #{tmcnn_forward.1} parent=5 // pred_region
      %s421 = ssub.s32 %s9, 2
      // Predicated region
      $region41: #{tmcnn_forward.1} parent=39 // pred_check
        %p422 = pneg %p106
      $region42: #{tmcnn_forward.1} parent=39 // pred_check_branch
        %424 = sbr.rel (%p422) target = $region44
      $region43: #{tmcnn_forward.1} parent=39 // pred_region
        %s425 = smul.u32 16, %s15
        %p426 = scmp.lt.s32.totalorder %s425, 31
        %s427 = scalar_select %p426, %s425, 31
        %s428 = smul.addr %s427, 8
        %s429 = scalar_lea.vmem %s3, %s428
      $region44: #{tmcnn_forward.1} parent=39 // pred_fallthru
        _
    $region40: #{tmcnn_forward.1} parent=5 // pred_fallthru
      _
  $region6: #{tmcnn_forward.1} parent=0 // loop_footer
    %s13 = sadd.s32 1, %s9
  $region7: #{tmcnn_forward.1} parent=0 // loop_footer_branch
    %8 = sbr.rel target = $region3
  $region8: #{tmcnn_forward.1} parent=0 // loop_exit
    _

</llo_original>
